<compile_context>
chip_gen: v7x
topology: tpu7x:2x2x1
jax: 0.10.0
libtpu: 0.0.40
codegen_flags: <defaults>
</compile_context>

<pallas_src>
import jax
import jax.numpy as jnp
from jax.experimental import pallas as pl
from jax.experimental.pallas import tpu as pltpu

FEAT = 2     # input features live on sublanes (rows 0 and 1)
LANES = 128  # batch lives on lanes; one grid step per 128 samples


def xornet_kernel(w_ref, x_ref, o_ref):
    # w_ref: (6,) f32 in SMEM -> scalar weights [w1, w2, w3, w4, w5, w6]
    # x_ref: (FEAT, LANES) f32 in VMEM; row 0 = feature 0, row 1 = feature 1,
    #        batch laid out along lanes.
    # o_ref: (1, LANES) f32 lane-dense output row, batch on lanes.
    x0 = x_ref[0:1, :]          # (1, LANES) sublane-row read, no cross-lane gather
    x1 = x_ref[1:2, :]          # (1, LANES)

    w1 = w_ref[0]
    w2 = w_ref[1]
    w3 = w_ref[2]
    w4 = w_ref[3]
    w5 = w_ref[4]
    w6 = w_ref[5]

    # Layer 1: Linear(2, 2) with bias folded in as the immediate 1.0, then sigmoid.
    h0 = jax.nn.sigmoid(w1 * x0 + w2 * x1 + 1.0)
    h1 = jax.nn.sigmoid(w3 * x0 + w4 * x1 + 1.0)

    # Layer 2: Linear(2, 1) with bias folded in as the immediate 1.0, then sigmoid.
    o_ref[...] = jax.nn.sigmoid(w5 * h0 + w6 * h1 + 1.0)


@jax.jit
def xornet_forward(x, w_vec):
    """x: (batch, 2) float; w_vec: (6,) float32 = [w1..w6]. Returns (batch, 1) f32."""
    batch = x.shape[0]
    assert x.shape[1] == FEAT

    n_tiles = pl.cdiv(batch, LANES)          # static under jit
    padded = n_tiles * LANES

    # Feature-major packing: features on sublanes, batch on lanes, lane-padded.
    x_pad = jnp.zeros((FEAT, padded), jnp.float32).at[:, :batch].set(
        x.astype(jnp.float32).T)

    out = pl.pallas_call(
        xornet_kernel,
        out_shape=jax.ShapeDtypeStruct((1, padded), jnp.float32),
        grid=(n_tiles,),
        in_specs=[
            pl.BlockSpec(memory_space=pltpu.MemorySpace.SMEM),   # weights -> SMEM scalars
            pl.BlockSpec((FEAT, LANES), lambda i: (0, i)),       # x tile -> VMEM
        ],
        out_specs=pl.BlockSpec((1, LANES), lambda i: (0, i)),
        compiler_params=pltpu.CompilerParams(
            dimension_semantics=("parallel",)),
    )(w_vec, x_pad)

    # Batch is on lanes of the single output row; padded lanes are discarded.
    return out[0, :batch].reshape(batch, 1)


def xornet_reference(x, w1, w2, w3, w4, w5, w6):
    """Pure-JAX reference of the PyTorch forward (float32)."""
    w1_mat = jnp.array([[w1, w2], [w3, w4]], dtype=jnp.float32)
    w2_mat = jnp.array([[w5, w6]], dtype=jnp.float32)
    b1 = jnp.ones((2,), jnp.float32)
    b2 = jnp.ones((1,), jnp.float32)
    h = jax.nn.sigmoid(x.astype(jnp.float32) @ w1_mat.T + b1)
    return jax.nn.sigmoid(h @ w2_mat.T + b2)


if __name__ == "__main__":
    key = jax.random.PRNGKey(0)
    # Deterministic synthetic weights w1..w6 (module __init__ args), packed once.
    w_vec = jax.random.normal(key, (6,), dtype=jnp.float32)
    w1, w2, w3, w4, w5, w6 = [float(v) for v in w_vec]

    # XOR-style input: batch=4, features=2 (same shape as the training table).
    x = jnp.array([[0.0, 0.0], [0.0, 1.0], [1.0, 0.0], [1.0, 1.0]],
                  dtype=jnp.float32)

    out = xornet_forward(x, w_vec)
    out = jax.block_until_ready(out)

    ref = xornet_reference(x, w1, w2, w3, w4, w5, w6)
    assert out.shape == (4, 1)
    assert jnp.allclose(out, ref, atol=1e-5), (out, ref)
    print("KERNEL_OK")
</pallas_src>

<mosaic_0001>
module attributes {stable_mosaic.version = 11 : i64} {
  func.func @xornet_kernel(%arg0: i32, %arg1: memref<6xf32, #tpu.memory_space<smem>>, %arg2: memref<2x128xf32, #tpu.memory_space<vmem>>, %arg3: memref<1x128xf32, #tpu.memory_space<vmem>>) attributes {dimension_semantics = [#tpu.dimension_semantics<parallel>], iteration_bounds = array<i64: 1>, scalar_prefetch = 0 : i64, scratch_operands = 0 : i64, tpu.core_type = #tpu.core_type<tc>, window_params = [{transform_indices = @transform_0, window_bounds = array<i64: 6>}, {transform_indices = @transform_1, window_bounds = array<i64: 2, 128>}, {transform_indices = @transform_2, window_bounds = array<i64: 1, 128>}]} {
    %c0 = arith.constant 0 : index
    %c0_0 = arith.constant 0 : index
    %0 = vector.load %arg2[%c0, %c0_0] : memref<2x128xf32, #tpu.memory_space<vmem>>, vector<1x128xf32>
    %c1 = arith.constant 1 : index
    %c0_1 = arith.constant 0 : index
    %1 = vector.load %arg2[%c1, %c0_1] : memref<2x128xf32, #tpu.memory_space<vmem>>, vector<1x128xf32>
    %c0_2 = arith.constant 0 : index
    %2 = memref.load %arg1[%c0_2] : memref<6xf32, #tpu.memory_space<smem>>
    %c1_3 = arith.constant 1 : index
    %3 = memref.load %arg1[%c1_3] : memref<6xf32, #tpu.memory_space<smem>>
    %c2 = arith.constant 2 : index
    %4 = memref.load %arg1[%c2] : memref<6xf32, #tpu.memory_space<smem>>
    %c3 = arith.constant 3 : index
    %5 = memref.load %arg1[%c3] : memref<6xf32, #tpu.memory_space<smem>>
    %c4 = arith.constant 4 : index
    %6 = memref.load %arg1[%c4] : memref<6xf32, #tpu.memory_space<smem>>
    %c5 = arith.constant 5 : index
    %7 = memref.load %arg1[%c5] : memref<6xf32, #tpu.memory_space<smem>>
    %8 = vector.broadcast %2 : f32 to vector<1x128xf32>
    %9 = arith.mulf %8, %0 : vector<1x128xf32>
    %10 = vector.broadcast %3 : f32 to vector<1x128xf32>
    %11 = arith.mulf %10, %1 : vector<1x128xf32>
    %12 = arith.addf %9, %11 : vector<1x128xf32>
    %cst = arith.constant 1.000000e+00 : f32
    %13 = vector.broadcast %cst : f32 to vector<1x128xf32>
    %14 = arith.addf %12, %13 : vector<1x128xf32>
    %15 = arith.negf %14 : vector<1x128xf32>
    %16 = math.exp %15 : vector<1x128xf32>
    %cst_4 = arith.constant 1.000000e+00 : f32
    %17 = vector.broadcast %cst_4 : f32 to vector<1x128xf32>
    %18 = arith.addf %17, %16 : vector<1x128xf32>
    %19 = arith.divf %17, %18 : vector<1x128xf32>
    %20 = vector.broadcast %4 : f32 to vector<1x128xf32>
    %21 = arith.mulf %20, %0 : vector<1x128xf32>
    %22 = vector.broadcast %5 : f32 to vector<1x128xf32>
    %23 = arith.mulf %22, %1 : vector<1x128xf32>
    %24 = arith.addf %21, %23 : vector<1x128xf32>
    %cst_5 = arith.constant 1.000000e+00 : f32
    %25 = vector.broadcast %cst_5 : f32 to vector<1x128xf32>
    %26 = arith.addf %24, %25 : vector<1x128xf32>
    %27 = arith.negf %26 : vector<1x128xf32>
    %28 = math.exp %27 : vector<1x128xf32>
    %cst_6 = arith.constant 1.000000e+00 : f32
    %29 = vector.broadcast %cst_6 : f32 to vector<1x128xf32>
    %30 = arith.addf %29, %28 : vector<1x128xf32>
    %31 = arith.divf %29, %30 : vector<1x128xf32>
    %32 = vector.broadcast %6 : f32 to vector<1x128xf32>
    %33 = arith.mulf %32, %19 : vector<1x128xf32>
    %34 = vector.broadcast %7 : f32 to vector<1x128xf32>
    %35 = arith.mulf %34, %31 : vector<1x128xf32>
    %36 = arith.addf %33, %35 : vector<1x128xf32>
    %cst_7 = arith.constant 1.000000e+00 : f32
    %37 = vector.broadcast %cst_7 : f32 to vector<1x128xf32>
    %38 = arith.addf %36, %37 : vector<1x128xf32>
    %39 = arith.negf %38 : vector<1x128xf32>
    %40 = math.exp %39 : vector<1x128xf32>
    %cst_8 = arith.constant 1.000000e+00 : f32
    %41 = vector.broadcast %cst_8 : f32 to vector<1x128xf32>
    %42 = arith.addf %41, %40 : vector<1x128xf32>
    %43 = arith.divf %41, %42 : vector<1x128xf32>
    %c0_9 = arith.constant 0 : index
    %c0_10 = arith.constant 0 : index
    %44 = vector.load %arg3[%c0_9, %c0_10] : memref<1x128xf32, #tpu.memory_space<vmem>>, vector<1x128xf32>
    tpu.vector_store %arg3[%c0_9, %c0_10], %43 {strides = array<i32>} : memref<1x128xf32, #tpu.memory_space<vmem>>, vector<1x128xf32>,
    return
  }
  func.func @transform_0(%arg0: i32) -> i32 {
    %c0_i32 = arith.constant 0 : i32
    %c0_i32_0 = arith.constant 0 : i32
    return %c0_i32 : i32
  }
  func.func @transform_1(%arg0: i32) -> (i32, i32) {
    %c0_i32 = arith.constant 0 : i32
    %c0_i32_0 = arith.constant 0 : i32
    return %c0_i32, %arg0 : i32, i32
  }
  func.func @transform_2(%arg0: i32) -> (i32, i32) {
    %c0_i32 = arith.constant 0 : i32
    %c0_i32_0 = arith.constant 0 : i32
    return %c0_i32, %arg0 : i32, i32
  }
}

</mosaic_0001>

<llo_original>
// kernel: xornet_forward.1
$region0: #{xornet_forward.1}
  #allocation0 [shape = 'u32[]', space=smem, size = 0x4, offset = 0x4, fixed_abs, tag = 'smem constant byte address 0x4 - core index']
  #allocation1 [shape = 'u32[144,128]{1,0:T(1,128)}', space=vmem, size = 0x12000, scoped, tag = 'internal scratch']
  %s0 = inlined_call_operand.vmem [shape: f32[6], index: 0, kind: input, shape index: {}]
  %s1 = inlined_call_operand.vmem [shape: f32[2,128], index: 1, kind: input, shape index: {}]
  %s2 = inlined_call_operand.vmem [shape: f32[1,128], index: 2, kind: output, shape index: {}]
  %s3 = sld [smem:[#allocation0]]
  $region22: #{xornet_forward.1} parent=0
    _
  %s5 = ssub.s32 1, %s3
  %s6 = scalar_select 0, %s5, %s3
  $region1: #{xornet_forward.1} parent=0
    #allocation2 [shape = 'u8[512]{0}', space=smem, size = 0x200, scoped, tag = 'input window, operand 0, single buffered']
    #allocation3 [shape = 's32[1]{0}', space=sflag, size = 0x4, scoped, tag = 'scoped memory for xornet_forward.1']
    %7 = vsyncpa [#allocation3], 0
    // Predicated region
    $region2: #{xornet_forward.1} parent=1 // pred_check
      _
    $region3: #{xornet_forward.1} parent=1 // pred_check_branch
      %9 = sbr.rel (0) target = $region5
    $region4: #{xornet_forward.1} parent=1 // pred_region
      %s11 = ssub.s32 16, 16
      %12 = vsyncadd [#allocation3], %s11
      %s14 = sshll.u32 %s0, 4
      %s15 = int_to_ptr.vmem [resolvable:$true] %s14
      %17 = dma.vmem_to_smem %s15, 16, [#allocation2], [#allocation3]
    $region5: #{xornet_forward.1} parent=1 // pred_fallthru
      _
    // Predicated region
    $region6: #{xornet_forward.1} parent=1 // pred_check
      _
    $region7: #{xornet_forward.1} parent=1 // pred_check_branch
      %19 = sbr.rel (0) target = $region9
    $region8: #{xornet_forward.1} parent=1 // pred_region
      _
    $region9: #{xornet_forward.1} parent=1 // pred_fallthru
      _
    // Predicated region
    $region10: #{xornet_forward.1} parent=1 // pred_check
      _
    $region11: #{xornet_forward.1} parent=1 // pred_check_branch
      %21 = sbr.rel (0) target = $region13
    $region12: #{xornet_forward.1} parent=1 // pred_region
      %22 = dma.done [#allocation3], 16
    $region13: #{xornet_forward.1} parent=1 // pred_fallthru
      _
    %23 = sfence
    %v24 = vld [vmem:[%s1] sm:$0x1]
    %v25 = vld [vmem:[%s1 + $0x1] sm:$0x1]
    %s26 = sld [smem:[#allocation2]]
    %s27 = sld [smem:[#allocation2 + $0x1]]
    %s28 = sld [smem:[#allocation2 + $0x2]]
    %s29 = sld [smem:[#allocation2 + $0x3]]
    %s30 = sld [smem:[#allocation2 + $0x4]]
    %s31 = sld [smem:[#allocation2 + $0x5]]
    %v32 = vstv %s26
    %v33 = vmul.f32 %v32, %v24
    %v34 = vstv %s27
    %v35 = vmul.f32 %v34, %v25
    %v36 = vadd.f32 %v33, %v35
    %v37 = vadd.f32 %v36, 1.0
    %v38 = vxor.u32 %v37, 2147483648
    %v39 = vmul.f32 %v38, 1.442695
    %v40 = vpow.pop %v39
    %v41 = vadd.f32 %v40, 1.0
    %v42 = vrcp.pop %v41
    %v43 = vmul.f32 1.0, %v42
    %v44 = vstv %s28
    %v45 = vmul.f32 %v44, %v24
    %v46 = vstv %s29
    %v47 = vmul.f32 %v46, %v25
    %v48 = vadd.f32 %v45, %v47
    %v49 = vadd.f32 %v48, 1.0
    %v50 = vxor.u32 %v49, 2147483648
    %v51 = vmul.f32 %v50, 1.442695
    %v52 = vpow.pop %v51
    %v53 = vadd.f32 %v52, 1.0
    %v54 = vrcp.pop %v53
    %v55 = vmul.f32 1.0, %v54
    %v56 = vstv %s30
    %v57 = vmul.f32 %v56, %v43
    %v58 = vstv %s31
    %v59 = vmul.f32 %v58, %v55
    %v60 = vadd.f32 %v57, %v59
    %v61 = vadd.f32 %v60, 1.0
    %v62 = vxor.u32 %v61, 2147483648
    %v63 = vmul.f32 %v62, 1.442695
    %v64 = vpow.pop %v63
    %v65 = vadd.f32 %v64, 1.0
    %v66 = vrcp.pop %v65
    %v67 = vmul.f32 1.0, %v66
    %68 = vst [vmem:[%s2] sm:$0x1] %v67
    // Predicated region
    $region14: #{xornet_forward.1} parent=1 // pred_check
      _
    $region15: #{xornet_forward.1} parent=1 // pred_check_branch
      %70 = sbr.rel (0) target = $region17
    $region16: #{xornet_forward.1} parent=1 // pred_region
      _
    $region17: #{xornet_forward.1} parent=1 // pred_fallthru
      _
    // Predicated region
    $region18: #{xornet_forward.1} parent=1 // pred_check
      _
    $region19: #{xornet_forward.1} parent=1 // pred_check_branch
      %72 = sbr.rel (0) target = $region21
    $region20: #{xornet_forward.1} parent=1 // pred_region
      _
    $region21: #{xornet_forward.1} parent=1 // pred_fallthru
      _
    %73 = vsyncpa [#allocation3], 1

</llo_original>
